<compile_context>
chip_gen: v7x
topology: tpu7x:2x2x1
jax: 0.10.0
libtpu: 0.0.40
codegen_flags: <defaults>
</compile_context>

<pallas_src>
import jax
import jax.numpy as jnp
from jax import lax
from jax.experimental import pallas as pl
from jax.experimental.pallas import tpu as pltpu


HIDE_DIMS = 32    # hardcoded in the PyTorch forward


def _round_up(x, m):
    return (x + m - 1) // m * m


def _default_tile_and_vmem():
    """Per-generation tile cap + scoped-VMEM limit.

    VMEM per tile (f32, including last-dim padding to 128 lanes):
      inputs         2 arrays x 2 buffers x TB*128*4 B   = 2048*TB
      h1/h2 scratch  ~2 x TB*128*4 B                     = 1024*TB
      output         2 buffers x TB*4 B (lane-dense row) =    8*TB
      params         ~40 KB
    => ~3 KiB per batch row: TB=4096 -> ~12.5 MiB, TB=8192 -> ~25 MiB.
    """
    try:
        info = pltpu.get_tpu_info()
        vmem_cap = getattr(info, "vmem_capacity_bytes", 64 * 1024 * 1024)
    except Exception:  # pragma: no cover - conservative fallback
        vmem_cap = 64 * 1024 * 1024
    if vmem_cap >= 96 * 1024 * 1024:
        # v5e / v6e: 128 MiB physical VMEM; lowest HBM BW, so bigger tiles amortize the
        # ~0.35 us per-grid-step overhead.
        return 8192, 64 * 1024 * 1024
    # v7x: 64 MiB physical / 32 MiB default scoped VMEM.
    return 4096, 32 * 1024 * 1024


def _mlp_kernel(e1_ref, e2_ref, w1a_ref, w1b_ref, b1_ref, w2_ref, b2_ref,
                w3r_ref, b3_ref, o_ref):
    """Fused concat + 3-layer MLP for one batch tile; all operands resident in VMEM."""
    # concat([e1, e2], axis=1) @ W1  ==  e1 @ W1[:F] + e2 @ W1[F:]
    h1 = (jnp.dot(e1_ref[...], w1a_ref[...], preferred_element_type=jnp.float32)
          + jnp.dot(e2_ref[...], w1b_ref[...], preferred_element_type=jnp.float32)
          + b1_ref[...])
    h1 = jnp.maximum(h1, 0.0)                                              # (TB, 32)

    h2 = jnp.dot(h1, w2_ref[...], preferred_element_type=jnp.float32) + b2_ref[...]
    h2 = jnp.maximum(h2, 0.0)                                              # (TB, 5)

    # Final Linear(5 -> 1), emitted lane-dense as a (1, TB) row:
    #   (1,5) . (TB,5)^T -> (1,TB)   (dot_general contracting both operands' last dim,
    # i.e. trans_b matmul).  No ReLU after the last Linear.
    out_row = lax.dot_general(w3r_ref[...], h2, (((1,), (1,)), ((), ())),
                              preferred_element_type=jnp.float32) + b3_ref[...]
    o_ref[...] = out_row.astype(o_ref.dtype)                               # (1, TB)


def pref_predict_forward(node_embeds1, node_embeds2, params, *,
                         max_tile=None, vmem_limit_bytes=None, use_bf16=False):
    """node_embeds1/2: (B, 2*hide_dims) f32. Returns (B, 1) f32."""
    assert node_embeds1.shape == node_embeds2.shape
    B, F = node_embeds1.shape                       # F = 2*hide_dims

    w1, b1, w2, b2, w3, b3 = params
    H = w1.shape[1]
    assert w1.shape[0] == 2 * F
    # Split the first-layer weight so the concat fuses into the kernel.
    w1a, w1b = w1[:F], w1[F:]                       # (F, H) each
    w3_row = w3.reshape(1, -1)                      # (1, 5)
    b3r = b3.reshape(1, 1)                          # (1, 1)

    if use_bf16:
        # Optional bandwidth optimization: halves the binding HBM activation read.
        # Dots still accumulate in f32; biases/later layers stay f32.
        node_embeds1 = node_embeds1.astype(jnp.bfloat16)
        node_embeds2 = node_embeds2.astype(jnp.bfloat16)
        w1a = w1a.astype(jnp.bfloat16)
        w1b = w1b.astype(jnp.bfloat16)

    dt_tile, dt_vmem = _default_tile_and_vmem()
    max_tile = dt_tile if max_tile is None else max_tile
    vmem_limit_bytes = dt_vmem if vmem_limit_bytes is None else vmem_limit_bytes

    # Batch tiling.  No wrapper-side padding: grid = cdiv(B, TB); Pallas handles the
    # ragged last block and the wrapper slices off the OOB tail of the output.
    TB = min(max_tile, _round_up(max(B, 1), 8))
    if B > 256 and pl.cdiv(B, TB) < 2:
        # Give both v7x TensorCores work: split into >=2 tiles, last dim 128-aligned.
        TB = _round_up(pl.cdiv(B, 2), 128)
    num_tiles = pl.cdiv(B, TB)

    act_spec = pl.BlockSpec((TB, F), lambda i: (i, 0))
    # Parameters (~40 KB total): constant block index -> DMA'd once, resident across tiles.
    resident = lambda shape: pl.BlockSpec(shape, lambda i: (0, 0))

    in_itemsize = node_embeds1.dtype.itemsize
    param_bytes = sum(int(p.size) * p.dtype.itemsize
                      for p in (w1a, w1b, b1, w2, b2, w3_row, b3r))
    cost = pl.CostEstimate(
        flops=2 * B * (2 * F * H + H * 5 + 5),
        transcendentals=0,
        bytes_accessed=B * 2 * F * in_itemsize + B * 4 + param_bytes,
    )

    out_row = pl.pallas_call(
        _mlp_kernel,
        out_shape=jax.ShapeDtypeStruct((1, num_tiles * TB), jnp.float32),
        grid=(num_tiles,),
        in_specs=[
            act_spec,                # node_embeds1 tile  (TB, F)
            act_spec,                # node_embeds2 tile  (TB, F)
            resident((F, H)),        # w1a
            resident((F, H)),        # w1b
            resident((1, H)),        # b1
            resident((H, 5)),        # w2
            resident((1, 5)),        # b2
            resident((1, 5)),        # w3 row
            resident((1, 1)),        # b3
        ],
        out_specs=pl.BlockSpec((1, TB), lambda i: (0, i)),   # lane-dense output row
        compiler_params=pltpu.CompilerParams(
            dimension_semantics=("parallel",),   # lets v7x shard the batch over its 2 TCs
            vmem_limit_bytes=vmem_limit_bytes,
        ),
        cost_estimate=cost,
    )(node_embeds1, node_embeds2, w1a, w1b, b1, w2, b2, w3_row, b3r)

    # Drop the ragged tail (garbage produced from OOB rows of the last block) and
    # restore the (B, 1) column layout of the PyTorch module.
    return out_row.reshape(-1)[:B].reshape(B, 1)


def init_params(key, hide_dims=HIDE_DIMS):
    """Deterministic init mimicking nn.Linear default (uniform +/- 1/sqrt(fan_in)).
    Only self.mlp is initialized since forward uses nothing else."""
    dims = [(hide_dims * 4, hide_dims), (hide_dims, 5), (5, 1)]
    params = []
    for (fan_in, fan_out) in dims:
        key, kw, kb = jax.random.split(key, 3)
        bound = 1.0 / jnp.sqrt(fan_in)
        w = jax.random.uniform(kw, (fan_in, fan_out), jnp.float32, -bound, bound)
        b = jax.random.uniform(kb, (1, fan_out), jnp.float32, -bound, bound)
        params += [w, b]
    return tuple(params)


def _reference(node_embeds1, node_embeds2, params):
    w1, b1, w2, b2, w3, b3 = params
    x = jnp.concatenate([node_embeds1, node_embeds2], axis=1)
    h1 = jnp.maximum(x @ w1 + b1, 0.0)
    h2 = jnp.maximum(h1 @ w2 + b2, 0.0)
    return h2 @ w3 + b3


if __name__ == "__main__":
    key = jax.random.PRNGKey(0)
    key, k1, k2, kp = jax.random.split(key, 4)

    params = init_params(kp)

    # Small shapes consistent with the module: batch=8, 2*hide_dims=64 features per input.
    B = 8
    e1 = jax.random.normal(k1, (B, 2 * HIDE_DIMS), jnp.float32)
    e2 = jax.random.normal(k2, (B, 2 * HIDE_DIMS), jnp.float32)

    out = jax.block_until_ready(pref_predict_forward(e1, e2, params))
    ref = _reference(e1, e2, params)
    assert out.shape == (B, 1), out.shape
    assert jnp.allclose(out, ref, atol=1e-5, rtol=1e-5), "mismatch vs reference"

    # Ragged batch (not a multiple of 8) exercises the cdiv / partial-last-block path
    # (no wrapper-side padding anymore).
    key, k3, k4 = jax.random.split(key, 3)
    B2 = 13
    e1b = jax.random.normal(k3, (B2, 2 * HIDE_DIMS), jnp.float32)
    e2b = jax.random.normal(k4, (B2, 2 * HIDE_DIMS), jnp.float32)
    out2 = jax.block_until_ready(pref_predict_forward(e1b, e2b, params))
    ref2 = _reference(e1b, e2b, params)
    assert out2.shape == (B2, 1), out2.shape
    assert jnp.allclose(out2, ref2, atol=1e-5, rtol=1e-5), "mismatch vs reference (ragged B)"

    # Optional bf16 activation path (bandwidth optimization); f32 accumulate, loose tol.
    out3 = jax.block_until_ready(pref_predict_forward(e1, e2, params, use_bf16=True))
    assert out3.shape == (B, 1), out3.shape
    assert jnp.allclose(out3, ref, atol=5e-2, rtol=5e-2), "mismatch vs reference (bf16)"

    print("KERNEL_OK")
</pallas_src>

<mosaic_0001>
module attributes {stable_mosaic.version = 11 : i64} {
  func.func @_mlp_kernel(%arg0: i32, %arg1: memref<8x64xf32, #tpu.memory_space<vmem>>, %arg2: memref<8x64xf32, #tpu.memory_space<vmem>>, %arg3: memref<64x32xf32, #tpu.memory_space<vmem>>, %arg4: memref<64x32xf32, #tpu.memory_space<vmem>>, %arg5: memref<1x32xf32, #tpu.memory_space<vmem>>, %arg6: memref<32x5xf32, #tpu.memory_space<vmem>>, %arg7: memref<1x5xf32, #tpu.memory_space<vmem>>, %arg8: memref<1x5xf32, #tpu.memory_space<vmem>>, %arg9: memref<1x1xf32, #tpu.memory_space<vmem>>, %arg10: memref<1x8xf32, #tpu.memory_space<vmem>>) attributes {dimension_semantics = [#tpu.dimension_semantics<parallel>], iteration_bounds = array<i64: 1>, scalar_prefetch = 0 : i64, scratch_operands = 0 : i64, tpu.core_type = #tpu.core_type<tc>, window_params = [{transform_indices = @transform_0, window_bounds = array<i64: 8, 64>}, {transform_indices = @transform_1, window_bounds = array<i64: 8, 64>}, {pipeline_mode = #tpu.pipeline_mode<synchronous>, transform_indices = @transform_2, window_bounds = array<i64: 64, 32>}, {pipeline_mode = #tpu.pipeline_mode<synchronous>, transform_indices = @transform_3, window_bounds = array<i64: 64, 32>}, {pipeline_mode = #tpu.pipeline_mode<synchronous>, transform_indices = @transform_4, window_bounds = array<i64: 1, 32>}, {pipeline_mode = #tpu.pipeline_mode<synchronous>, transform_indices = @transform_5, window_bounds = array<i64: 32, 5>}, {pipeline_mode = #tpu.pipeline_mode<synchronous>, transform_indices = @transform_6, window_bounds = array<i64: 1, 5>}, {pipeline_mode = #tpu.pipeline_mode<synchronous>, transform_indices = @transform_7, window_bounds = array<i64: 1, 5>}, {pipeline_mode = #tpu.pipeline_mode<synchronous>, transform_indices = @transform_8, window_bounds = array<i64: 1, 1>}, {transform_indices = @transform_9, window_bounds = array<i64: 1, 8>}]} {
    %c0 = arith.constant 0 : index
    %c0_0 = arith.constant 0 : index
    %0 = vector.load %arg1[%c0, %c0_0] : memref<8x64xf32, #tpu.memory_space<vmem>>, vector<8x64xf32>
    %c0_1 = arith.constant 0 : index
    %c0_2 = arith.constant 0 : index
    %1 = vector.load %arg3[%c0_1, %c0_2] : memref<64x32xf32, #tpu.memory_space<vmem>>, vector<64x32xf32>
    %cst = arith.constant dense<0.000000e+00> : vector<8x32xf32>
    %2 = tpu.matmul %0, %1, %cst {dimension_numbers = #tpu.dot_dimension_numbers<[1], [0], [0], [1], [0, 0, 1, 1], [], []>} : vector<8x64xf32>, vector<64x32xf32>, vector<8x32xf32> -> vector<8x32xf32>
    %c0_3 = arith.constant 0 : index
    %c0_4 = arith.constant 0 : index
    %3 = vector.load %arg2[%c0_3, %c0_4] : memref<8x64xf32, #tpu.memory_space<vmem>>, vector<8x64xf32>
    %c0_5 = arith.constant 0 : index
    %c0_6 = arith.constant 0 : index
    %4 = vector.load %arg4[%c0_5, %c0_6] : memref<64x32xf32, #tpu.memory_space<vmem>>, vector<64x32xf32>
    %cst_7 = arith.constant dense<0.000000e+00> : vector<8x32xf32>
    %5 = tpu.matmul %3, %4, %cst_7 {dimension_numbers = #tpu.dot_dimension_numbers<[1], [0], [0], [1], [0, 0, 1, 1], [], []>} : vector<8x64xf32>, vector<64x32xf32>, vector<8x32xf32> -> vector<8x32xf32>
    %6 = arith.addf %2, %5 : vector<8x32xf32>
    %c0_8 = arith.constant 0 : index
    %c0_9 = arith.constant 0 : index
    %7 = vector.load %arg5[%c0_8, %c0_9] : memref<1x32xf32, #tpu.memory_space<vmem>>, vector<1x32xf32>
    %8 = vector.broadcast %7 : vector<1x32xf32> to vector<8x32xf32>
    %9 = arith.addf %6, %8 : vector<8x32xf32>
    %cst_10 = arith.constant 0.000000e+00 : f32
    %10 = vector.broadcast %cst_10 : f32 to vector<8x32xf32>
    %11 = arith.maximumf %9, %10 : vector<8x32xf32>
    %c0_11 = arith.constant 0 : index
    %c0_12 = arith.constant 0 : index
    %12 = vector.load %arg6[%c0_11, %c0_12] : memref<32x5xf32, #tpu.memory_space<vmem>>, vector<32x5xf32>
    %cst_13 = arith.constant dense<0.000000e+00> : vector<8x5xf32>
    %13 = tpu.matmul %11, %12, %cst_13 {dimension_numbers = #tpu.dot_dimension_numbers<[1], [0], [0], [1], [0, 0, 1, 1], [], []>} : vector<8x32xf32>, vector<32x5xf32>, vector<8x5xf32> -> vector<8x5xf32>
    %c0_14 = arith.constant 0 : index
    %c0_15 = arith.constant 0 : index
    %14 = vector.load %arg7[%c0_14, %c0_15] : memref<1x5xf32, #tpu.memory_space<vmem>>, vector<1x5xf32>
    %15 = vector.broadcast %14 : vector<1x5xf32> to vector<8x5xf32>
    %16 = arith.addf %13, %15 : vector<8x5xf32>
    %cst_16 = arith.constant 0.000000e+00 : f32
    %17 = vector.broadcast %cst_16 : f32 to vector<8x5xf32>
    %18 = arith.maximumf %16, %17 : vector<8x5xf32>
    %c0_17 = arith.constant 0 : index
    %c0_18 = arith.constant 0 : index
    %19 = vector.load %arg8[%c0_17, %c0_18] : memref<1x5xf32, #tpu.memory_space<vmem>>, vector<1x5xf32>
    %cst_19 = arith.constant dense<0.000000e+00> : vector<1x8xf32>
    %20 = tpu.matmul %19, %18, %cst_19 {dimension_numbers = #tpu.dot_dimension_numbers<[1], [1], [0], [0], [0, 0, 1, 0], [], []>} : vector<1x5xf32>, vector<8x5xf32>, vector<1x8xf32> -> vector<1x8xf32>
    %c0_20 = arith.constant 0 : index
    %c0_21 = arith.constant 0 : index
    %21 = vector.load %arg9[%c0_20, %c0_21] : memref<1x1xf32, #tpu.memory_space<vmem>>, vector<1x1xf32>
    %22 = vector.broadcast %21 : vector<1x1xf32> to vector<1x8xf32>
    %23 = arith.addf %20, %22 : vector<1x8xf32>
    %c0_22 = arith.constant 0 : index
    %c0_23 = arith.constant 0 : index
    %24 = vector.load %arg10[%c0_22, %c0_23] : memref<1x8xf32, #tpu.memory_space<vmem>>, vector<1x8xf32>
    tpu.vector_store %arg10[%c0_22, %c0_23], %23 {strides = array<i32>} : memref<1x8xf32, #tpu.memory_space<vmem>>, vector<1x8xf32>,
    return
  }
  func.func @transform_0(%arg0: i32) -> (i32, i32) {
    %c0_i32 = arith.constant 0 : i32
    %c0_i32_0 = arith.constant 0 : i32
    return %arg0, %c0_i32 : i32, i32
  }
  func.func @transform_1(%arg0: i32) -> (i32, i32) {
    %c0_i32 = arith.constant 0 : i32
    %c0_i32_0 = arith.constant 0 : i32
    return %arg0, %c0_i32 : i32, i32
  }
  func.func @transform_2(%arg0: i32) -> (i32, i32) {
    %c0_i32 = arith.constant 0 : i32
    %c0_i32_0 = arith.constant 0 : i32
    %c0_i32_1 = arith.constant 0 : i32
    return %c0_i32, %c0_i32_0 : i32, i32
  }
  func.func @transform_3(%arg0: i32) -> (i32, i32) {
    %c0_i32 = arith.constant 0 : i32
    %c0_i32_0 = arith.constant 0 : i32
    %c0_i32_1 = arith.constant 0 : i32
    return %c0_i32, %c0_i32_0 : i32, i32
  }
  func.func @transform_4(%arg0: i32) -> (i32, i32) {
    %c0_i32 = arith.constant 0 : i32
    %c0_i32_0 = arith.constant 0 : i32
    %c0_i32_1 = arith.constant 0 : i32
    return %c0_i32, %c0_i32_0 : i32, i32
  }
  func.func @transform_5(%arg0: i32) -> (i32, i32) {
    %c0_i32 = arith.constant 0 : i32
    %c0_i32_0 = arith.constant 0 : i32
    %c0_i32_1 = arith.constant 0 : i32
    return %c0_i32, %c0_i32_0 : i32, i32
  }
  func.func @transform_6(%arg0: i32) -> (i32, i32) {
    %c0_i32 = arith.constant 0 : i32
    %c0_i32_0 = arith.constant 0 : i32
    %c0_i32_1 = arith.constant 0 : i32
    return %c0_i32, %c0_i32_0 : i32, i32
  }
  func.func @transform_7(%arg0: i32) -> (i32, i32) {
    %c0_i32 = arith.constant 0 : i32
    %c0_i32_0 = arith.constant 0 : i32
    %c0_i32_1 = arith.constant 0 : i32
    return %c0_i32, %c0_i32_0 : i32, i32
  }
  func.func @transform_8(%arg0: i32) -> (i32, i32) {
    %c0_i32 = arith.constant 0 : i32
    %c0_i32_0 = arith.constant 0 : i32
    %c0_i32_1 = arith.constant 0 : i32
    return %c0_i32, %c0_i32_0 : i32, i32
  }
  func.func @transform_9(%arg0: i32) -> (i32, i32) {
    %c0_i32 = arith.constant 0 : i32
    %c0_i32_0 = arith.constant 0 : i32
    return %c0_i32, %arg0 : i32, i32
  }
}

</mosaic_0001>

<llo_original>
// kernel: tpu_custom_call.1
$region0: #{tpu_custom_call.1}
  #allocation0 [shape = 'u32[]', space=smem, size = 0x4, offset = 0x4, fixed_abs, tag = 'smem constant byte address 0x4 - core index']
  #allocation1 [shape = 'u32[144,128]{1,0:T(1,128)}', space=vmem, size = 0x12000, scoped, tag = 'internal scratch']
  #allocation2 [shape = 'f32[1,1]{1,0:T(1,128)S(1)}', space=vmem, size = 0x200, scoped, tag = 'scoped memory for tpu_custom_call.1']
  %s0 = inlined_call_operand.vmem [shape: f32[8,64], index: 0, kind: input, shape index: {}]
  %s1 = inlined_call_operand.vmem [shape: f32[8,64], index: 1, kind: input, shape index: {}]
  %s2 = inlined_call_operand.vmem [shape: f32[64,32], index: 2, kind: input, shape index: {}]
  %s3 = inlined_call_operand.vmem [shape: f32[64,32], index: 3, kind: input, shape index: {}]
  %s4 = inlined_call_operand.vmem [shape: f32[1,32], index: 4, kind: input, shape index: {}]
  %s5 = inlined_call_operand.vmem [shape: f32[32,5], index: 5, kind: input, shape index: {}]
  %s6 = inlined_call_operand.vmem [shape: f32[1,5], index: 6, kind: input, shape index: {}]
  %s7 = inlined_call_operand.vmem [shape: f32[1,5], index: 7, kind: input, shape index: {}]
  %s8 = inlined_call_operand.<no memory space> [shape: f32[1,1], index: 8, kind: input, shape index: {}]
  %s9 = inlined_call_operand.hbm [shape: f32[1,8], index: 9, kind: output, shape index: {}]
  %s10 = sld [smem:[#allocation0]]
  $region46: #{tpu_custom_call.1} parent=0
    _
  %s12 = ssub.s32 1, %s10
  %s13 = scalar_select 0, %s12, %s10
  %v14 = vstv %s8
  %15 = vst [vmem:[#allocation2] sm:$0x1] %v14
  $region1: #{tpu_custom_call.1} parent=0
    #allocation3 [shape = 'u8[512]{0}', space=vmem, size = 0x400, scoped, tag = 'output window, operand 0, single buffered']
    #allocation4 [shape = 's32[1]{0}', space=sflag, size = 0x4, scoped, tag = 'scoped memory for tpu_custom_call.1']
    %16 = vsyncpa [#allocation4], 0
    // Predicated region
    $region2: #{tpu_custom_call.1} parent=1 // pred_check
      _
    $region3: #{tpu_custom_call.1} parent=1 // pred_check_branch
      %18 = sbr.rel (0) target = $region5
    $region4: #{tpu_custom_call.1} parent=1 // pred_region
      _
    $region5: #{tpu_custom_call.1} parent=1 // pred_fallthru
      _
    // Predicated region
    $region6: #{tpu_custom_call.1} parent=1 // pred_check
      _
    $region7: #{tpu_custom_call.1} parent=1 // pred_check_branch
      %20 = sbr.rel (0) target = $region9
    $region8: #{tpu_custom_call.1} parent=1 // pred_region
      _
    $region9: #{tpu_custom_call.1} parent=1 // pred_fallthru
      _
    // Predicated region
    $region10: #{tpu_custom_call.1} parent=1 // pred_check
      _
    $region11: #{tpu_custom_call.1} parent=1 // pred_check_branch
      %22 = sbr.rel (0) target = $region13
    $region12: #{tpu_custom_call.1} parent=1 // pred_region
      _
    $region13: #{tpu_custom_call.1} parent=1 // pred_fallthru
      _
    // Predicated region
    $region14: #{tpu_custom_call.1} parent=1 // pred_check
      _
    $region15: #{tpu_custom_call.1} parent=1 // pred_check_branch
      %24 = sbr.rel (0) target = $region17
    $region16: #{tpu_custom_call.1} parent=1 // pred_region
      _
    $region17: #{tpu_custom_call.1} parent=1 // pred_fallthru
      _
    // Predicated region
    $region18: #{tpu_custom_call.1} parent=1 // pred_check
      _
    $region19: #{tpu_custom_call.1} parent=1 // pred_check_branch
      %26 = sbr.rel (0) target = $region21
    $region20: #{tpu_custom_call.1} parent=1 // pred_region
      _
    $region21: #{tpu_custom_call.1} parent=1 // pred_fallthru
      _
    // Predicated region
    $region22: #{tpu_custom_call.1} parent=1 // pred_check
      _
    $region23: #{tpu_custom_call.1} parent=1 // pred_check_branch
      %28 = sbr.rel (0) target = $region25
    $region24: #{tpu_custom_call.1} parent=1 // pred_region
      _
    $region25: #{tpu_custom_call.1} parent=1 // pred_fallthru
      _
    // Predicated region
    $region26: #{tpu_custom_call.1} parent=1 // pred_check
      _
    $region27: #{tpu_custom_call.1} parent=1 // pred_check_branch
      %30 = sbr.rel (0) target = $region29
    $region28: #{tpu_custom_call.1} parent=1 // pred_region
      _
    $region29: #{tpu_custom_call.1} parent=1 // pred_fallthru
      _
    // Predicated region
    $region30: #{tpu_custom_call.1} parent=1 // pred_check
      _
    $region31: #{tpu_custom_call.1} parent=1 // pred_check_branch
      %32 = sbr.rel (0) target = $region33
    $region32: #{tpu_custom_call.1} parent=1 // pred_region
      _
    $region33: #{tpu_custom_call.1} parent=1 // pred_fallthru
      _
    // Predicated region
    $region34: #{tpu_custom_call.1} parent=1 // pred_check
      _
    $region35: #{tpu_custom_call.1} parent=1 // pred_check_branch
      %34 = sbr.rel (0) target = $region37
    $region36: #{tpu_custom_call.1} parent=1 // pred_region
      _
    $region37: #{tpu_custom_call.1} parent=1 // pred_fallthru
      _
    %v35 = vld [vmem:[%s0] sm:$0xff]
    %v36 = vld [vmem:[%s2] sm:$0xff]
    %v37 = vld [vmem:[%s2 + $0x8] sm:$0xff]
    %v38 = vld [vmem:[%s2 + $0x10] sm:$0xff]
    %v39 = vld [vmem:[%s2 + $0x18] sm:$0xff]
    %v40 = vld [vmem:[%s2 + $0x20] sm:$0xff]
    %v41 = vld [vmem:[%s2 + $0x28] sm:$0xff]
    %v42 = vld [vmem:[%s2 + $0x30] sm:$0xff]
    %v43 = vld [vmem:[%s2 + $0x38] sm:$0xff]
    %v44 = vld [vmem:[%s1] sm:$0xff]
    %v45 = vld [vmem:[%s3] sm:$0xff]
    %v46 = vld [vmem:[%s3 + $0x8] sm:$0xff]
    %v47 = vld [vmem:[%s3 + $0x10] sm:$0xff]
    %v48 = vld [vmem:[%s3 + $0x18] sm:$0xff]
    %v49 = vld [vmem:[%s3 + $0x20] sm:$0xff]
    %v50 = vld [vmem:[%s3 + $0x28] sm:$0xff]
    %v51 = vld [vmem:[%s3 + $0x30] sm:$0xff]
    %v52 = vld [vmem:[%s3 + $0x38] sm:$0xff]
    %vm53 = vcmask 523264
    %v55 = vsel %vm53, %v44, 0
    %57 = vmatprep.subr.mxu0 0.0
    %58 = vmatpush1.msra.mxu0 %v45
    %59 = vmatprep.subr.mxu0 0.0
    %60 = vmatpush1.msra.mxu0 %v46
    %61 = vmatprep.subr.mxu0 0.0
    %62 = vmatpush1.msra.mxu0 %v47
    %63 = vmatprep.subr.mxu0 0.0
    %64 = vmatpush1.msra.mxu0 %v48
    %65 = vmatprep.subr.mxu0 0.0
    %66 = vmatpush1.msra.mxu0 %v49
    %67 = vmatprep.subr.mxu0 0.0
    %68 = vmatpush1.msra.mxu0 %v50
    %69 = vmatprep.subr.mxu0 0.0
    %70 = vmatpush1.msra.mxu0 %v51
    %71 = vmatprep.subr.mxu0 0.0
    %72 = vmatpush1.msra.mxu0 %v52
    %73 = vmatprep.subr.mxu0 0.0
    %74 = vmatpush1.msra.mxu0 0.0
    %75 = vmatprep.subr.mxu0 0.0
    %76 = vmatpush1.msra.mxu0 0.0
    %77 = vmatprep.subr.mxu0 0.0
    %78 = vmatpush1.msra.mxu0 0.0
    %79 = vmatprep.subr.mxu0 0.0
    %80 = vmatpush1.msra.mxu0 0.0
    %81 = vmatprep.subr.mxu0 0.0
    %82 = vmatpush1.msra.mxu0 0.0
    %83 = vmatprep.subr.mxu0 0.0
    %84 = vmatpush1.msra.mxu0 0.0
    %85 = vmatprep.subr.mxu0 0.0
    %86 = vmatpush1.msra.mxu0 0.0
    %87 = vmatprep.subr.mxu0 0.0
    %88 = vmatpush1.msra.mxu0 0.0
    %89 = vmatprep.subr.mxu0 0.0
    %90 = vmatpush1.msra.mxu0 0.0
    %91 = vmatprep.subr.mxu0 0.0
    %92 = vmatpush1.msra.mxu0 0.0
    %93 = vmatprep.subr.mxu0 0.0
    %94 = vmatpush1.msra.mxu0 0.0
    %95 = vmatprep.subr.mxu0 0.0
    %96 = vmatpush1.msra.mxu0 0.0
    %97 = vmatprep.subr.mxu0 0.0
    %98 = vmatpush1.msra.mxu0 0.0
    %99 = vmatprep.subr.mxu0 0.0
    %100 = vmatpush1.msra.mxu0 0.0
    %101 = vmatprep.subr.mxu0 0.0
    %102 = vmatpush1.msra.mxu0 0.0
    %103 = vmatprep.subr.mxu0 0.0
    %104 = vmatpush1.msra.mxu0 0.0
    %105 = vmatprep.subr.mxu0 0.0
    %106 = vmatpush1.msra.mxu0 0.0
    %107 = vmatprep.subr.mxu0 0.0
    %108 = vmatpush1.msra.mxu0 0.0
    %109 = vmatprep.subr.mxu0 0.0
    %110 = vmatpush1.msra.mxu0 0.0
    %111 = vmatprep.subr.mxu0 0.0
    %112 = vmatpush1.msra.mxu0 0.0
    %113 = vmatprep.subr.mxu0 0.0
    %114 = vmatpush1.msra.mxu0 0.0
    %115 = vmatprep.subr.mxu0 0.0
    %116 = vmatpush1.msra.mxu0 0.0
    %117 = vmatprep.subr.mxu0 0.0
    %118 = vmatpush1.msra.mxu0 0.0
    %119 = vmatprep.subr.mxu0 0.0
    %120 = vmatpush1.msra.mxu0 0.0
    %121 = vmatprep.mubr.f32.mxu0 0.0
    %122 = vmatmul.mubr.f32.gmra.mrb[0].mxu0 %v55
    %v123 = vpop.f32.mrb[0].mxu0
    %v124 = vadd.f32 0.0, %v123
    %v125 = vpop.f32.mrb[0].mxu0
    %126 = vdwg.mxu0
    %v128 = vsel %vm53, %v35, 0
    %130 = vmatprep.subr.mxu0 0.0
    %131 = vmatpush1.msra.mxu0 %v36
    %132 = vmatprep.subr.mxu0 0.0
    %133 = vmatpush1.msra.mxu0 %v37
    %134 = vmatprep.subr.mxu0 0.0
    %135 = vmatpush1.msra.mxu0 %v38
    %136 = vmatprep.subr.mxu0 0.0
    %137 = vmatpush1.msra.mxu0 %v39
    %138 = vmatprep.subr.mxu0 0.0
    %139 = vmatpush1.msra.mxu0 %v40
    %140 = vmatprep.subr.mxu0 0.0
    %141 = vmatpush1.msra.mxu0 %v41
    %142 = vmatprep.subr.mxu0 0.0
    %143 = vmatpush1.msra.mxu0 %v42
    %144 = vmatprep.subr.mxu0 0.0
    %145 = vmatpush1.msra.mxu0 %v43
    %146 = vmatprep.subr.mxu0 0.0
    %147 = vmatpush1.msra.mxu0 0.0
    %148 = vmatprep.subr.mxu0 0.0
    %149 = vmatpush1.msra.mxu0 0.0
    %150 = vmatprep.subr.mxu0 0.0
    %151 = vmatpush1.msra.mxu0 0.0
    %152 = vmatprep.subr.mxu0 0.0
    %153 = vmatpush1.msra.mxu0 0.0
    %154 = vmatprep.subr.mxu0 0.0
    %155 = vmatpush1.msra.mxu0 0.0
    %156 = vmatprep.subr.mxu0 0.0
    %157 = vmatpush1.msra.mxu0 0.0
    %158 = vmatprep.subr.mxu0 0.0
    %159 = vmatpush1.msra.mxu0 0.0
    %160 = vmatprep.subr.mxu0 0.0
    %161 = vmatpush1.msra.mxu0 0.0
    %162 = vmatprep.subr.mxu0 0.0
    %163 = vmatpush1.msra.mxu0 0.0
    %164 = vmatprep.subr.mxu0 0.0
    %165 = vmatpush1.msra.mxu0 0.0
    %166 = vmatprep.subr.mxu0 0.0
    %167 = vmatpush1.msra.mxu0 0.0
    %168 = vmatprep.subr.mxu0 0.0
    %169 = vmatpush1.msra.mxu0 0.0
    %170 = vmatprep.subr.mxu0 0.0
    %171 = vmatpush1.msra.mxu0 0.0
    %172 = vmatprep.subr.mxu0 0.0
    %173 = vmatpush1.msra.mxu0 0.0
    %174 = vmatprep.subr.mxu0 0.0
    %175 = vmatpush1.msra.mxu0 0.0
    %176 = vmatprep.subr.mxu0 0.0
    %177 = vmatpush1.msra.mxu0 0.0
    %178 = vmatprep.subr.mxu0 0.0
    %179 = vmatpush1.msra.mxu0 0.0
    %180 = vmatprep.subr.mxu0 0.0
    %181 = vmatpush1.msra.mxu0 0.0
    %182 = vmatprep.subr.mxu0 0.0
    %183 = vmatpush1.msra.mxu0 0.0
    %184 = vmatprep.subr.mxu0 0.0
    %185 = vmatpush1.msra.mxu0 0.0
    %186 = vmatprep.subr.mxu0 0.0
    %187 = vmatpush1.msra.mxu0 0.0
    %188 = vmatprep.subr.mxu0 0.0
    %189 = vmatpush1.msra.mxu0 0.0
    %190 = vmatprep.subr.mxu0 0.0
    %191 = vmatpush1.msra.mxu0 0.0
    %192 = vmatprep.subr.mxu0 0.0
    %193 = vmatpush1.msra.mxu0 0.0
    %194 = vmatprep.mubr.f32.mxu0 0.0
    %195 = vmatmul.mubr.f32.gmra.mrb[0].mxu0 %v128
    %v196 = vpop.f32.mrb[0].mxu0
    %v197 = vadd.f32 %v124, %v196
    %v198 = vpop.f32.mrb[0].mxu0
    %199 = vdwg.mxu0
    %v200 = vld [vmem:[%s4] sm:$0x1]
    %v202 = vlaneseq
    %v203 = vshrl.u32 %v202, 7
    %v204 = vsub.s32 0, %v203
    %v205 = vrot.slane %v200, %v204
    %v207 = vadd.f32 %v197, %v205
    %v208 = vmax.f32 %v207, 0.0
    %v209 = vld [vmem:[%s5] sm:$0xff]
    %v210 = vld [vmem:[%s5 + $0x8] sm:$0xff]
    %v211 = vld [vmem:[%s5 + $0x10] sm:$0xff]
    %v212 = vld [vmem:[%s5 + $0x18] sm:$0xff]
    %v213 = vld [vmem:[%s6] sm:$0x1]
    %v215 = vlaneseq
    %v216 = vshrl.u32 %v215, 7
    %v217 = vsub.s32 0, %v216
    %v218 = vrot.slane %v213, %v217
    %vm220 = vcmask 261120
    %v222 = vsel %vm220, %v208, 0
    %224 = vmatprep.subr.mxu0 0.0
    %225 = vmatpush1.msra.mxu0 %v209
    %226 = vmatprep.subr.mxu0 0.0
    %227 = vmatpush1.msra.mxu0 %v210
    %228 = vmatprep.subr.mxu0 0.0
    %229 = vmatpush1.msra.mxu0 %v211
    %230 = vmatprep.subr.mxu0 0.0
    %231 = vmatpush1.msra.mxu0 %v212
    %232 = vmatprep.subr.mxu0 0.0
    %233 = vmatpush1.msra.mxu0 0.0
    %234 = vmatprep.subr.mxu0 0.0
    %235 = vmatpush1.msra.mxu0 0.0
    %236 = vmatprep.subr.mxu0 0.0
    %237 = vmatpush1.msra.mxu0 0.0
    %238 = vmatprep.subr.mxu0 0.0
    %239 = vmatpush1.msra.mxu0 0.0
    %240 = vmatprep.subr.mxu0 0.0
    %241 = vmatpush1.msra.mxu0 0.0
    %242 = vmatprep.subr.mxu0 0.0
    %243 = vmatpush1.msra.mxu0 0.0
    %244 = vmatprep.subr.mxu0 0.0
    %245 = vmatpush1.msra.mxu0 0.0
    %246 = vmatprep.subr.mxu0 0.0
    %247 = vmatpush1.msra.mxu0 0.0
    %248 = vmatprep.subr.mxu0 0.0
    %249 = vmatpush1.msra.mxu0 0.0
    %250 = vmatprep.subr.mxu0 0.0
    %251 = vmatpush1.msra.mxu0 0.0
    %252 = vmatprep.subr.mxu0 0.0
    %253 = vmatpush1.msra.mxu0 0.0
    %254 = vmatprep.subr.mxu0 0.0
    %255 = vmatpush1.msra.mxu0 0.0
    %256 = vmatprep.subr.mxu0 0.0
    %257 = vmatpush1.msra.mxu0 0.0
    %258 = vmatprep.subr.mxu0 0.0
    %259 = vmatpush1.msra.mxu0 0.0
    %260 = vmatprep.subr.mxu0 0.0
    %261 = vmatpush1.msra.mxu0 0.0
    %262 = vmatprep.subr.mxu0 0.0
    %263 = vmatpush1.msra.mxu0 0.0
    %264 = vmatprep.subr.mxu0 0.0
    %265 = vmatpush1.msra.mxu0 0.0
    %266 = vmatprep.subr.mxu0 0.0
    %267 = vmatpush1.msra.mxu0 0.0
    %268 = vmatprep.subr.mxu0 0.0
    %269 = vmatpush1.msra.mxu0 0.0
    %270 = vmatprep.subr.mxu0 0.0
    %271 = vmatpush1.msra.mxu0 0.0
    %272 = vmatprep.subr.mxu0 0.0
    %273 = vmatpush1.msra.mxu0 0.0
    %274 = vmatprep.subr.mxu0 0.0
    %275 = vmatpush1.msra.mxu0 0.0
    %276 = vmatprep.subr.mxu0 0.0
    %277 = vmatpush1.msra.mxu0 0.0
    %278 = vmatprep.subr.mxu0 0.0
    %279 = vmatpush1.msra.mxu0 0.0
    %280 = vmatprep.subr.mxu0 0.0
    %281 = vmatpush1.msra.mxu0 0.0
    %282 = vmatprep.subr.mxu0 0.0
    %283 = vmatpush1.msra.mxu0 0.0
    %284 = vmatprep.subr.mxu0 0.0
    %285 = vmatpush1.msra.mxu0 0.0
    %286 = vmatprep.subr.mxu0 0.0
    %287 = vmatpush1.msra.mxu0 0.0
    %288 = vmatprep.mubr.f32.mxu0 0.0
    %289 = vmatmul.mubr.f32.gmra.mrb[0].mxu0 %v222
    %v290 = vpop.f32.mrb[0].mxu0
    %v291 = vadd.f32 %v218, %v290
    %v292 = vpop.f32.mrb[0].mxu0
    %293 = vdwg.mxu0
    %v294 = vmax.f32 %v291, 0.0
    %v295 = vld [vmem:[%s7] sm:$0x1]
    %v296 = vld [vmem:[#allocation2] sm:$0x1]
    %298 = vset.pattern.permute.xlu0 0
    %299 = vperm.xlu0 %298, %v296
    %v300 = vpop.permute.xlu0 %299
    %v302 = vlaneseq
    %v303 = vshrl.u32 %v302, 7
    %v304 = vsub.s32 0, %v303
    %v305 = vrot.slane %v300, %v304
    %vm306 = vcmask 39936
    %v308 = vsel %vm306, %v295, 0
    %v311 = vsel %vm306, %v294, 0
    %313 = vmatprep.subr.mxu0 0.0
    %314 = vmatpush1.xpose.msra.mxu0 %v311
    %315 = vmatprep.subr.mxu0 0.0
    %316 = vmatpush1.xpose.msra.mxu0 0.0
    %317 = vmatprep.subr.mxu0 0.0
    %318 = vmatpush1.xpose.msra.mxu0 0.0
    %319 = vmatprep.subr.mxu0 0.0
    %320 = vmatpush1.xpose.msra.mxu0 0.0
    %321 = vmatprep.subr.mxu0 0.0
    %322 = vmatpush1.xpose.msra.mxu0 0.0
    %323 = vmatprep.subr.mxu0 0.0
    %324 = vmatpush1.xpose.msra.mxu0 0.0
    %325 = vmatprep.subr.mxu0 0.0
    %326 = vmatpush1.xpose.msra.mxu0 0.0
    %327 = vmatprep.subr.mxu0 0.0
    %328 = vmatpush1.xpose.msra.mxu0 0.0
    %329 = vmatprep.subr.mxu0 0.0
    %330 = vmatpush1.xpose.msra.mxu0 0.0
    %331 = vmatprep.subr.mxu0 0.0
    %332 = vmatpush1.xpose.msra.mxu0 0.0
    %333 = vmatprep.subr.mxu0 0.0
    %334 = vmatpush1.xpose.msra.mxu0 0.0
    %335 = vmatprep.subr.mxu0 0.0
    %336 = vmatpush1.xpose.msra.mxu0 0.0
    %337 = vmatprep.subr.mxu0 0.0
    %338 = vmatpush1.xpose.msra.mxu0 0.0
    %339 = vmatprep.subr.mxu0 0.0
    %340 = vmatpush1.xpose.msra.mxu0 0.0
    %341 = vmatprep.subr.mxu0 0.0
    %342 = vmatpush1.xpose.msra.mxu0 0.0
    %343 = vmatprep.subr.mxu0 0.0
    %344 = vmatpush1.xpose.msra.mxu0 0.0
    %345 = vmatprep.subr.mxu0 0.0
    %346 = vmatpush1.xpose.msra.mxu0 0.0
    %347 = vmatprep.subr.mxu0 0.0
    %348 = vmatpush1.xpose.msra.mxu0 0.0
    %349 = vmatprep.subr.mxu0 0.0
    %350 = vmatpush1.xpose.msra.mxu0 0.0
    %351 = vmatprep.subr.mxu0 0.0
    %352 = vmatpush1.xpose.msra.mxu0 0.0
    %353 = vmatprep.subr.mxu0 0.0
    %354 = vmatpush1.xpose.msra.mxu0 0.0
    %355 = vmatprep.subr.mxu0 0.0
    %356 = vmatpush1.xpose.msra.mxu0 0.0
    %357 = vmatprep.subr.mxu0 0.0
    %358 = vmatpush1.xpose.msra.mxu0 0.0
    %359 = vmatprep.subr.mxu0 0.0
    %360 = vmatpush1.xpose.msra.mxu0 0.0
    %361 = vmatprep.subr.mxu0 0.0
    %362 = vmatpush1.xpose.msra.mxu0 0.0
    %363 = vmatprep.subr.mxu0 0.0
    %364 = vmatpush1.xpose.msra.mxu0 0.0
    %365 = vmatprep.subr.mxu0 0.0
    %366 = vmatpush1.xpose.msra.mxu0 0.0
    %367 = vmatprep.subr.mxu0 0.0
    %368 = vmatpush1.xpose.msra.mxu0 0.0
    %369 = vmatprep.subr.mxu0 0.0
    %370 = vmatpush1.xpose.msra.mxu0 0.0
    %371 = vmatprep.subr.mxu0 0.0
    %372 = vmatpush1.xpose.msra.mxu0 0.0
    %373 = vmatprep.subr.mxu0 0.0
    %374 = vmatpush1.xpose.msra.mxu0 0.0
    %375 = vmatprep.subr.mxu0 0.0
    %376 = vmatpush1.xpose.msra.mxu0 0.0
    %377 = vmatprep.mubr.f32.mxu0 0.0
    %378 = vmatmul.mubr.f32.gmra.mrb[0].mxu0 %v308
    %v379 = vpop.f32.mrb[0].mxu0
    %v380 = vadd.f32 %v305, %v379
    %v381 = vpop.f32.mrb[0].mxu0
    %382 = vdwg.mxu0
    %vm383 = vcmask 57344
    %384 = vst.msk [vmem:[#allocation3] sm:$0x1] %vm383, %v380
    // Predicated region
    $region38: #{tpu_custom_call.1} parent=1 // pred_check
      _
    $region39: #{tpu_custom_call.1} parent=1 // pred_check_branch
      %386 = sbr.rel (0) target = $region41
    $region40: #{tpu_custom_call.1} parent=1 // pred_region
      %s388 = ssub.s32 16, 16
      %389 = vsyncadd [#allocation4], %s388
      %s391 = sshll.u32 [#allocation3], 4
      %s392 = int_to_ptr.vmem [resolvable:$true] %s391
      %394 = dma.vmem_to_hbm [thread:$0]  %s392, 16, %s9, [#allocation4]
    $region41: #{tpu_custom_call.1} parent=1 // pred_fallthru
      _
    // Predicated region
    $region42: #{tpu_custom_call.1} parent=1 // pred_check
      _
    $region43: #{tpu_custom_call.1} parent=1 // pred_check_branch
      %396 = sbr.rel (0) target = $region45
    $region44: #{tpu_custom_call.1} parent=1 // pred_region
      %397 = dma.done [#allocation4], 16
    $region45: #{tpu_custom_call.1} parent=1 // pred_fallthru
      _
    %398 = vsyncpa [#allocation4], 1

</llo_original>
